<compile_context>
chip_gen: v7x
topology: tpu7x:2x2x1
jax: 0.10.0
libtpu: 0.0.40
codegen_flags: <defaults>
</compile_context>

<pallas_src>
import jax
import jax.numpy as jnp
from jax.experimental import pallas as pl
from jax.experimental.pallas import tpu as pltpu


def _bahdanau_kernel(qw_ref, k_ref, ua_wT_ref, va_w_ref, ctx_ref, wts_ref):
    # Per-grid-step refs (TB batch elements each):
    #   qw_ref   : (TB, H)     Wa(query) + wa_b + ua_b  (precomputed in wrapper)
    #   k_ref    : (TB, S, H)  keys
    #   ua_wT_ref: (H, H)      Ua weight pre-transposed (in_features, out_features)
    #   va_w_ref : (1, H)      Va weight
    #   ctx_ref  : (TB, H)     context output
    #   wts_ref  : (TB, S)     attention weights output
    TB, S, H = k_ref.shape

    keys = k_ref[...]                                            # (TB, S, H)

    # Ua(keys): flatten batch*seq so the MXU sees one dense (TB*S, H) @ (H, H).
    ku = jnp.dot(keys.reshape(TB * S, H), ua_wT_ref[...],
                 preferred_element_type=jnp.float32)             # (TB*S, H)

    # tanh(Wa(q) + Ua(k) + b_wa + b_ua); both biases already folded into qw.
    t = jnp.tanh(qw_ref[...][:, None, :] + ku.reshape(TB, S, H))  # (TB, S, H)

    # Scores: contract H with the Va weight -> (TB, S). VPU mul + lane reduce,
    # no in-kernel transpose. va_b is a per-score constant -> cancels in softmax.
    scores = jnp.sum(t * va_w_ref[...], axis=-1)                 # (TB, S)

    # Softmax over the sequence axis (torch dim=1).
    m = jnp.max(scores, axis=-1, keepdims=True)                  # (TB, 1)
    e = jnp.exp(scores - m)                                      # (TB, S)
    w = e * pl.reciprocal(jnp.sum(e, axis=-1, keepdims=True))    # (TB, S)

    # context = weights @ keys (batched, flash-style) -> (TB, 1, H)
    ctx = jnp.einsum("bqs,bsh->bqh", w[:, None, :], keys,
                     preferred_element_type=jnp.float32)

    ctx_ref[...] = ctx.reshape(TB, H).astype(ctx_ref.dtype)
    wts_ref[...] = w.astype(wts_ref.dtype)


def _pick_batch_block(B, S, H):
    """Pick the per-step batch tile TB and the padded batch size Bp."""
    per_batch_bytes = S * H * 4                 # f32 keys per batch element
    budget = 8 * 1024 * 1024                    # conservative: fits v7x scoped VMEM
    # keys are double-buffered and the kernel holds ~2 more f32 (TB,S,H) temps.
    cap = max(1, budget // (8 * per_batch_bytes))
    if B <= cap:
        return B, B                             # single grid step, TB == B
    tb = max(8, (min(cap, B) // 8) * 8)         # multiple of 8 -> sublane-dense blocks
    bp = ((B + tb - 1) // tb) * tb
    return tb, bp


@jax.jit
def bahdanau_attention(query, keys, wa_w, wa_b, ua_w, ua_b, va_w, va_b):
    B, H = query.shape
    _, S, _ = keys.shape

    # Hoisted: one full-batch XLA matmul for Wa(query), biases folded in
    # (ua_b is added to every sequence row, so adding it here is exact).
    # va_b cancels in the softmax and is dropped entirely.
    del va_b
    qw = query @ wa_w.T + (wa_b + ua_b)          # (B, H)
    ua_wT = ua_w.T                               # contract keys @ Ua^T in-kernel

    TB, Bp = _pick_batch_block(B, S, H)
    if Bp != B:
        qw = jnp.pad(qw, ((0, Bp - B), (0, 0)))
        keys_in = jnp.pad(keys, ((0, Bp - B), (0, 0), (0, 0)))
    else:
        keys_in = keys

    rep = lambda b: (0, 0)
    ctx, wts = pl.pallas_call(
        _bahdanau_kernel,
        out_shape=(
            jax.ShapeDtypeStruct((Bp, H), jnp.float32),
            jax.ShapeDtypeStruct((Bp, S), jnp.float32),
        ),
        grid_spec=pltpu.PrefetchScalarGridSpec(
            num_scalar_prefetch=0,
            grid=(Bp // TB,),
            in_specs=[
                pl.BlockSpec((TB, H), lambda b: (b, 0)),        # qw (precomputed)
                pl.BlockSpec((TB, S, H), lambda b: (b, 0, 0)),  # keys
                pl.BlockSpec((H, H), rep),                      # Ua^T weight
                pl.BlockSpec((1, H), rep),                      # Va weight
            ],
            out_specs=[
                pl.BlockSpec((TB, H), lambda b: (b, 0)),        # context
                pl.BlockSpec((TB, S), lambda b: (b, 0)),        # weights
            ],
        ),
        compiler_params=pltpu.CompilerParams(
            dimension_semantics=("parallel",)),
    )(qw, keys_in, ua_wT, va_w)

    # context: (B, 1, H)   weights: (B, S)   — matches torch module outputs.
    return ctx[:B].reshape(B, 1, H), wts[:B]


def _reference(query, keys, wa_w, wa_b, ua_w, ua_b, va_w, va_b):
    qw = query @ wa_w.T + wa_b                          # (B, H)
    ku = jnp.einsum("bsh,oh->bso", keys, ua_w) + ua_b   # (B, S, H)
    t = jnp.tanh(qw[:, None, :] + ku)                   # (B, S, H)
    scores = jnp.einsum("bsh,oh->bso", t, va_w) + va_b  # (B, S, 1)
    weights = jax.nn.softmax(scores, axis=1)            # (B, S, 1)
    context = jnp.einsum("bso,bsh->boh", weights, keys)  # (B, 1, H)
    return context, weights[..., 0]


if __name__ == "__main__":
    B, S, H = 2, 8, 32

    key = jax.random.PRNGKey(0)
    kq, kk, k1, k2, k3, k4, k5, k6 = jax.random.split(key, 8)

    query = jax.random.normal(kq, (B, H), dtype=jnp.float32)
    keys = jax.random.normal(kk, (B, S, H), dtype=jnp.float32)

    # Deterministic "PyTorch-style" linear params (out_features, in_features).
    bound = 1.0 / (H ** 0.5)
    wa_w = jax.random.uniform(k1, (H, H), jnp.float32, -bound, bound)
    wa_b = jax.random.uniform(k2, (H,), jnp.float32, -bound, bound)
    ua_w = jax.random.uniform(k3, (H, H), jnp.float32, -bound, bound)
    ua_b = jax.random.uniform(k4, (H,), jnp.float32, -bound, bound)
    va_w = jax.random.uniform(k5, (1, H), jnp.float32, -bound, bound)
    va_b = jax.random.uniform(k6, (1,), jnp.float32, -bound, bound)

    ctx, wts = bahdanau_attention(query, keys, wa_w, wa_b, ua_w, ua_b, va_w, va_b)
    jax.block_until_ready((ctx, wts))

    ctx_ref, wts_ref = _reference(query, keys, wa_w, wa_b, ua_w, ua_b, va_w, va_b)

    assert ctx.shape == (B, 1, H) and wts.shape == (B, S)
    assert jnp.allclose(ctx, ctx_ref, atol=1e-5, rtol=1e-5)
    assert jnp.allclose(wts, wts_ref, atol=1e-5, rtol=1e-5)

    print("KERNEL_OK")
</pallas_src>

<mosaic_0001>
module attributes {stable_mosaic.version = 11 : i64} {
  func.func @_bahdanau_kernel(%arg0: i32, %arg1: memref<2x32xf32, #tpu.memory_space<vmem>>, %arg2: memref<2x8x32xf32, #tpu.memory_space<vmem>>, %arg3: memref<32x32xf32, #tpu.memory_space<vmem>>, %arg4: memref<1x32xf32, #tpu.memory_space<vmem>>, %arg5: memref<2x32xf32, #tpu.memory_space<vmem>>, %arg6: memref<2x8xf32, #tpu.memory_space<vmem>>) attributes {dimension_semantics = [#tpu.dimension_semantics<parallel>], iteration_bounds = array<i64: 1>, scalar_prefetch = 0 : i64, scratch_operands = 0 : i64, tpu.core_type = #tpu.core_type<tc>, window_params = [{transform_indices = @transform_0, window_bounds = array<i64: 2, 32>}, {transform_indices = @transform_1, window_bounds = array<i64: 2, 8, 32>}, {pipeline_mode = #tpu.pipeline_mode<synchronous>, transform_indices = @transform_2, window_bounds = array<i64: 32, 32>}, {pipeline_mode = #tpu.pipeline_mode<synchronous>, transform_indices = @transform_3, window_bounds = array<i64: 1, 32>}, {transform_indices = @transform_4, window_bounds = array<i64: 2, 32>}, {transform_indices = @transform_5, window_bounds = array<i64: 2, 8>}]} {
    %c0 = arith.constant 0 : index
    %c0_0 = arith.constant 0 : index
    %c0_1 = arith.constant 0 : index
    %0 = vector.load %arg2[%c0, %c0_0, %c0_1] : memref<2x8x32xf32, #tpu.memory_space<vmem>>, vector<2x8x32xf32>
    %1 = vector.shape_cast %0 : vector<2x8x32xf32> to vector<16x32xf32>
    %c0_2 = arith.constant 0 : index
    %c0_3 = arith.constant 0 : index
    %2 = vector.load %arg3[%c0_2, %c0_3] : memref<32x32xf32, #tpu.memory_space<vmem>>, vector<32x32xf32>
    %cst = arith.constant dense<0.000000e+00> : vector<16x32xf32>
    %3 = tpu.matmul %1, %2, %cst {dimension_numbers = #tpu.dot_dimension_numbers<[1], [0], [0], [1], [0, 0, 1, 1], [], []>} : vector<16x32xf32>, vector<32x32xf32>, vector<16x32xf32> -> vector<16x32xf32>
    %c0_4 = arith.constant 0 : index
    %c0_5 = arith.constant 0 : index
    %4 = vector.load %arg1[%c0_4, %c0_5] : memref<2x32xf32, #tpu.memory_space<vmem>>, vector<2x32xf32>
    %5 = vector.shape_cast %4 : vector<2x32xf32> to vector<2x1x32xf32>
    %6 = vector.shape_cast %3 : vector<16x32xf32> to vector<2x8x32xf32>
    %7 = vector.broadcast %5 : vector<2x1x32xf32> to vector<2x8x32xf32>
    %8 = arith.addf %7, %6 : vector<2x8x32xf32>
    %9 = math.tanh %8 : vector<2x8x32xf32>
    %c0_6 = arith.constant 0 : index
    %c0_7 = arith.constant 0 : index
    %10 = vector.load %arg4[%c0_6, %c0_7] : memref<1x32xf32, #tpu.memory_space<vmem>>, vector<1x32xf32>
    %11 = vector.shape_cast %10 : vector<1x32xf32> to vector<1x1x32xf32>
    %12 = vector.broadcast %11 : vector<1x1x32xf32> to vector<2x8x32xf32>
    %13 = arith.mulf %9, %12 : vector<2x8x32xf32>
    %cst_8 = arith.constant dense<0.000000e+00> : vector<2x8xf32>
    %14 = vector.multi_reduction <add>, %13, %cst_8 [2] : vector<2x8x32xf32> to vector<2x8xf32>
    %cst_9 = arith.constant dense<0xFF800000> : vector<2xf32>
    %15 = vector.multi_reduction <maximumf>, %14, %cst_9 [1] : vector<2x8xf32> to vector<2xf32>
    %16 = vector.shape_cast %15 : vector<2xf32> to vector<2x1xf32>
    %17 = vector.broadcast %16 : vector<2x1xf32> to vector<2x8xf32>
    %18 = arith.subf %14, %17 : vector<2x8xf32>
    %19 = math.exp %18 : vector<2x8xf32>
    %cst_10 = arith.constant dense<0.000000e+00> : vector<2xf32>
    %20 = vector.multi_reduction <add>, %19, %cst_10 [1] : vector<2x8xf32> to vector<2xf32>
    %21 = vector.shape_cast %20 : vector<2xf32> to vector<2x1xf32>
    %22 = tpu.reciprocal %21 : vector<2x1xf32> -> vector<2x1xf32>
    %23 = vector.broadcast %22 : vector<2x1xf32> to vector<2x8xf32>
    %24 = arith.mulf %19, %23 : vector<2x8xf32>
    %25 = vector.shape_cast %24 : vector<2x8xf32> to vector<2x1x8xf32>
    "tpu.trace_start"() <{level = 10 : i32, message = "bqs,bsh->bqh"}> : () -> ()
    %cst_11 = arith.constant dense<0.000000e+00> : vector<2x1x32xf32>
    %26 = tpu.matmul %25, %0, %cst_11 {dimension_numbers = #tpu.dot_dimension_numbers<[2], [1], [1], [2], [0, 0, 0, 1, 1, 2], [0], [0]>} : vector<2x1x8xf32>, vector<2x8x32xf32>, vector<2x1x32xf32> -> vector<2x1x32xf32>
    "tpu.trace_stop"() : () -> ()
    %27 = vector.shape_cast %26 : vector<2x1x32xf32> to vector<2x32xf32>
    %c0_12 = arith.constant 0 : index
    %c0_13 = arith.constant 0 : index
    %28 = vector.load %arg5[%c0_12, %c0_13] : memref<2x32xf32, #tpu.memory_space<vmem>>, vector<2x32xf32>
    tpu.vector_store %arg5[%c0_12, %c0_13], %27 {strides = array<i32>} : memref<2x32xf32, #tpu.memory_space<vmem>>, vector<2x32xf32>,
    %c0_14 = arith.constant 0 : index
    %c0_15 = arith.constant 0 : index
    %29 = vector.load %arg6[%c0_14, %c0_15] : memref<2x8xf32, #tpu.memory_space<vmem>>, vector<2x8xf32>
    tpu.vector_store %arg6[%c0_14, %c0_15], %24 {strides = array<i32>} : memref<2x8xf32, #tpu.memory_space<vmem>>, vector<2x8xf32>,
    return
  }
  func.func @transform_0(%arg0: i32) -> (i32, i32) {
    %c0_i32 = arith.constant 0 : i32
    %c0_i32_0 = arith.constant 0 : i32
    return %arg0, %c0_i32 : i32, i32
  }
  func.func @transform_1(%arg0: i32) -> (i32, i32, i32) {
    %c0_i32 = arith.constant 0 : i32
    %c0_i32_0 = arith.constant 0 : i32
    %c0_i32_1 = arith.constant 0 : i32
    return %arg0, %c0_i32, %c0_i32_0 : i32, i32, i32
  }
  func.func @transform_2(%arg0: i32) -> (i32, i32) {
    %c0_i32 = arith.constant 0 : i32
    %c0_i32_0 = arith.constant 0 : i32
    %c0_i32_1 = arith.constant 0 : i32
    return %c0_i32, %c0_i32_0 : i32, i32
  }
  func.func @transform_3(%arg0: i32) -> (i32, i32) {
    %c0_i32 = arith.constant 0 : i32
    %c0_i32_0 = arith.constant 0 : i32
    %c0_i32_1 = arith.constant 0 : i32
    return %c0_i32, %c0_i32_0 : i32, i32
  }
  func.func @transform_4(%arg0: i32) -> (i32, i32) {
    %c0_i32 = arith.constant 0 : i32
    %c0_i32_0 = arith.constant 0 : i32
    return %arg0, %c0_i32 : i32, i32
  }
  func.func @transform_5(%arg0: i32) -> (i32, i32) {
    %c0_i32 = arith.constant 0 : i32
    %c0_i32_0 = arith.constant 0 : i32
    return %arg0, %c0_i32 : i32, i32
  }
}

</mosaic_0001>

<llo_original>
// kernel: bahdanau_attention.1
$region0: #{bahdanau_attention.1}
  #allocation0 [shape = 'u32[]', space=smem, size = 0x4, offset = 0x4, fixed_abs, tag = 'smem constant byte address 0x4 - core index']
  #allocation1 [shape = 'u32[144,128]{1,0:T(1,128)}', space=vmem, size = 0x12000, scoped, tag = 'internal scratch']
  %s0 = inlined_call_operand.vmem [shape: f32[2,32], index: 0, kind: input, shape index: {}]
  %s1 = inlined_call_operand.vmem [shape: f32[2,8,32], index: 1, kind: input, shape index: {}]
  %s2 = inlined_call_operand.vmem [shape: f32[32,32], index: 2, kind: input, shape index: {}]
  %s3 = inlined_call_operand.vmem [shape: f32[1,32], index: 3, kind: input, shape index: {}]
  %s4 = inlined_call_operand.hbm [shape: f32[2,32], index: 4, kind: output, shape index: {0}]
  %s5 = inlined_call_operand.hbm [shape: f32[2,8], index: 5, kind: output, shape index: {1}]
  %6 = xla_tuple %s4, %s5
  %s7 = sld [smem:[#allocation0]]
  $region34: #{bahdanau_attention.1} parent=0
    _
  %s9 = ssub.s32 1, %s7
  %s10 = scalar_select 0, %s9, %s7
  $region1: #{bahdanau_attention.1} parent=0
    #allocation2 [shape = 'u8[1024]{0}', space=vmem, size = 0x400, scoped, tag = 'output window, operand 0, single buffered']
    #allocation3 [shape = 's32[1]{0}', space=sflag, size = 0x4, scoped, tag = 'scoped memory for bahdanau_attention.1']
    #allocation4 [shape = 'u8[1024]{0}', space=vmem, size = 0x400, scoped, tag = 'output window, operand 1, single buffered']
    #allocation5 [shape = 's32[1]{0}', space=sflag, size = 0x4, scoped, tag = 'scoped memory for bahdanau_attention.1']
    %11 = vsyncpa [#allocation3], 0
    %12 = vsyncpa [#allocation5], 0
    // Predicated region
    $region2: #{bahdanau_attention.1} parent=1 // pred_check
      _
    $region3: #{bahdanau_attention.1} parent=1 // pred_check_branch
      %14 = sbr.rel (0) target = $region5
    $region4: #{bahdanau_attention.1} parent=1 // pred_region
      _
    $region5: #{bahdanau_attention.1} parent=1 // pred_fallthru
      _
    // Predicated region
    $region6: #{bahdanau_attention.1} parent=1 // pred_check
      _
    $region7: #{bahdanau_attention.1} parent=1 // pred_check_branch
      %16 = sbr.rel (0) target = $region9
    $region8: #{bahdanau_attention.1} parent=1 // pred_region
      _
    $region9: #{bahdanau_attention.1} parent=1 // pred_fallthru
      _
    // Predicated region
    $region10: #{bahdanau_attention.1} parent=1 // pred_check
      _
    $region11: #{bahdanau_attention.1} parent=1 // pred_check_branch
      %18 = sbr.rel (0) target = $region13
    $region12: #{bahdanau_attention.1} parent=1 // pred_region
      _
    $region13: #{bahdanau_attention.1} parent=1 // pred_fallthru
      _
    // Predicated region
    $region14: #{bahdanau_attention.1} parent=1 // pred_check
      _
    $region15: #{bahdanau_attention.1} parent=1 // pred_check_branch
      %20 = sbr.rel (0) target = $region17
    $region16: #{bahdanau_attention.1} parent=1 // pred_region
      _
    $region17: #{bahdanau_attention.1} parent=1 // pred_fallthru
      _
    %v21 = vld [vmem:[%s1] sm:$0xff]
    %v22 = vld [vmem:[%s1 + $0x8] sm:$0xff]
    %v23 = vld [vmem:[%s2] sm:$0xff]
    %v24 = vld [vmem:[%s2 + $0x8] sm:$0xff]
    %v25 = vld [vmem:[%s2 + $0x10] sm:$0xff]
    %v26 = vld [vmem:[%s2 + $0x18] sm:$0xff]
    %vm27 = vcmask 261120
    %v29 = vsel %vm27, %v21, 0
    %v32 = vsel %vm27, %v22, 0
    %34 = vmatprep.subr.mxu0 0.0
    %35 = vmatpush1.msra.mxu0 %v23
    %36 = vmatprep.subr.mxu0 0.0
    %37 = vmatpush1.msra.mxu0 %v24
    %38 = vmatprep.subr.mxu0 0.0
    %39 = vmatpush1.msra.mxu0 %v25
    %40 = vmatprep.subr.mxu0 0.0
    %41 = vmatpush1.msra.mxu0 %v26
    %42 = vmatprep.subr.mxu0 0.0
    %43 = vmatpush1.msra.mxu0 0.0
    %44 = vmatprep.subr.mxu0 0.0
    %45 = vmatpush1.msra.mxu0 0.0
    %46 = vmatprep.subr.mxu0 0.0
    %47 = vmatpush1.msra.mxu0 0.0
    %48 = vmatprep.subr.mxu0 0.0
    %49 = vmatpush1.msra.mxu0 0.0
    %50 = vmatprep.subr.mxu0 0.0
    %51 = vmatpush1.msra.mxu0 0.0
    %52 = vmatprep.subr.mxu0 0.0
    %53 = vmatpush1.msra.mxu0 0.0
    %54 = vmatprep.subr.mxu0 0.0
    %55 = vmatpush1.msra.mxu0 0.0
    %56 = vmatprep.subr.mxu0 0.0
    %57 = vmatpush1.msra.mxu0 0.0
    %58 = vmatprep.subr.mxu0 0.0
    %59 = vmatpush1.msra.mxu0 0.0
    %60 = vmatprep.subr.mxu0 0.0
    %61 = vmatpush1.msra.mxu0 0.0
    %62 = vmatprep.subr.mxu0 0.0
    %63 = vmatpush1.msra.mxu0 0.0
    %64 = vmatprep.subr.mxu0 0.0
    %65 = vmatpush1.msra.mxu0 0.0
    %66 = vmatprep.subr.mxu0 0.0
    %67 = vmatpush1.msra.mxu0 0.0
    %68 = vmatprep.subr.mxu0 0.0
    %69 = vmatpush1.msra.mxu0 0.0
    %70 = vmatprep.subr.mxu0 0.0
    %71 = vmatpush1.msra.mxu0 0.0
    %72 = vmatprep.subr.mxu0 0.0
    %73 = vmatpush1.msra.mxu0 0.0
    %74 = vmatprep.subr.mxu0 0.0
    %75 = vmatpush1.msra.mxu0 0.0
    %76 = vmatprep.subr.mxu0 0.0
    %77 = vmatpush1.msra.mxu0 0.0
    %78 = vmatprep.subr.mxu0 0.0
    %79 = vmatpush1.msra.mxu0 0.0
    %80 = vmatprep.subr.mxu0 0.0
    %81 = vmatpush1.msra.mxu0 0.0
    %82 = vmatprep.subr.mxu0 0.0
    %83 = vmatpush1.msra.mxu0 0.0
    %84 = vmatprep.subr.mxu0 0.0
    %85 = vmatpush1.msra.mxu0 0.0
    %86 = vmatprep.subr.mxu0 0.0
    %87 = vmatpush1.msra.mxu0 0.0
    %88 = vmatprep.subr.mxu0 0.0
    %89 = vmatpush1.msra.mxu0 0.0
    %90 = vmatprep.subr.mxu0 0.0
    %91 = vmatpush1.msra.mxu0 0.0
    %92 = vmatprep.subr.mxu0 0.0
    %93 = vmatpush1.msra.mxu0 0.0
    %94 = vmatprep.subr.mxu0 0.0
    %95 = vmatpush1.msra.mxu0 0.0
    %96 = vmatprep.subr.mxu0 0.0
    %97 = vmatpush1.msra.mxu0 0.0
    %98 = vmatprep.mubr.f32.mxu0 0.0
    %99 = vmatmul.mubr.f32.gmra.mrb[0].mxu0 %v29
    %v100 = vpop.f32.mrb[0].mxu0
    %v101 = vadd.f32 0.0, %v100
    %v102 = vpop.f32.mrb[0].mxu0
    %103 = vmatprep.mubr.f32.mxu0 0.0
    %104 = vmatmul.mubr.f32.gmra.mrb[0].mxu0 %v32
    %v105 = vpop.f32.mrb[0].mxu0
    %v106 = vadd.f32 0.0, %v105
    %v107 = vpop.f32.mrb[0].mxu0
    %108 = vdwg.mxu0
    %v109 = vld [vmem:[%s0] sm:$0x3]
    %v112 = vunpack.c.l.s4 1966171168
    %v113 = vunpack.c.0.s8 %v112
    %v114 = vlaneseq
    %v115 = vshrl.u32 %v114, 7
    %v116 = vsub.s32 %v113, %v115
    %v117 = vrot.slane %v109, %v116
    %v118 = vcombine.high %v117, %v117
    %v120 = vunpack.c.l.s4 1966171168
    %v121 = vunpack.c.0.s8 %v120
    %v122 = vlaneseq
    %v123 = vshrl.u32 %v122, 7
    %v124 = vsub.s32 %v121, %v123
    %v125 = vrot.slane %v117, %v124
    %v127 = vunpack.c.l.s4 1966171168
    %v128 = vunpack.c.0.s8 %v127
    %v129 = vlaneseq
    %v130 = vshrl.u32 %v129, 7
    %v131 = vsub.s32 %v128, %v130
    %v132 = vrot.slane %v118, %v131
    %v133 = vlaneseq
    %v134 = vshrl.u32 %v133, 7
    %v135 = vsub.s32 0, %v134
    %v136 = vrot.slane %v125, %v135
    %v137 = vlaneseq
    %v138 = vshrl.u32 %v137, 7
    %v139 = vsub.s32 0, %v138
    %v140 = vrot.slane %v132, %v139
    %v143 = vadd.f32 %v136, %v101
    %v144 = vadd.f32 %v140, %v106
    %v145 = vtanh.pop %v143
    %v146 = vtanh.pop %v144
    %v147 = vld [vmem:[%s3] sm:$0x1]
    %v149 = vlaneseq
    %v150 = vshrl.u32 %v149, 7
    %v151 = vsub.s32 0, %v150
    %v152 = vrot.slane %v147, %v151
    %v154 = vmul.f32 %v145, %v152
    %v155 = vmul.f32 %v146, %v152
    %v156 = vsel %vm27, %v154, 0.0
    %157 = vadd.xlane.f32.xlu0 %v156
    %v158 = vpop.xlane.xlu0 %157
    %v159 = vsel %vm27, %v155, 0.0
    %160 = vadd.xlane.f32.xlu0 %v159
    %v161 = vpop.xlane.xlu0 %160
    %v164 = vlaneseq
    %v165 = vand.u32 %v164, 127
    %v166 = vlaneseq
    %v167 = vshrl.u32 %v166, 7
    %v168 = vsub.s32 %v165, %v167
    %v169 = vrot.slane %v158, %v168
    %v170 = vlaneseq
    %v171 = vshrl.u32 %v170, 7
    %v172 = vsub.s32 %v165, %v171
    %v173 = vrot.slane %v161, %v172
    %vm174 = vcmask 1041409
    %v175 = vsel %vm174, %v173, %v169
    %vm177 = vcmask 58368
    %v178 = vsel %vm177, %v175, -inf
    %179 = vmax.xlane.f32.xlu0 %v178
    %v180 = vpop.xlane.xlu0 %179
    %v182 = vlaneseq
    %v183 = vshrl.u32 %v182, 7
    %v184 = vsub.s32 0, %v183
    %v185 = vrot.slane %v180, %v184
    %v186 = vlaneseq
    %v187 = vshrl.u32 %v186, 7
    %v188 = vsub.s32 1, %v187
    %v189 = vrot.slane %v180, %v188
    %v192 = vsub.f32 %v158, %v185
    %v193 = vsub.f32 %v161, %v189
    %v194 = vmul.f32 %v192, 1.442695
    %v195 = vpow.pop %v194
    %v196 = vmul.f32 %v193, 1.442695
    %v197 = vpow.pop %v196
    %200 = vset.pattern.permute.xlu0 0
    %201 = vperm.xlu0 %200, %v195
    %v202 = vpop.permute.xlu0 %201
    %203 = vset.pattern.permute.xlu0 0
    %204 = vperm.xlu0 %203, %v197
    %v205 = vpop.permute.xlu0 %204
    %v206 = vlaneseq
    %v207 = vshrl.u32 %v206, 7
    %v208 = vsub.s32 %v165, %v207
    %v209 = vrot.slane %v202, %v208
    %v210 = vlaneseq
    %v211 = vshrl.u32 %v210, 7
    %v212 = vsub.s32 %v165, %v211
    %v213 = vrot.slane %v205, %v212
    %v214 = vsel %vm174, %v213, %v209
    %v216 = vsel %vm177, %v214, 0.0
    %217 = vadd.xlane.f32.xlu0 %v216
    %v218 = vpop.xlane.xlu0 %217
    %v219 = vrcp.pop %v218
    %v221 = vlaneseq
    %v222 = vshrl.u32 %v221, 7
    %v223 = vsub.s32 0, %v222
    %v224 = vrot.slane %v219, %v223
    %v225 = vlaneseq
    %v226 = vshrl.u32 %v225, 7
    %v227 = vsub.s32 1, %v226
    %v228 = vrot.slane %v219, %v227
    %v231 = vmul.f32 %v195, %v224
    %v232 = vmul.f32 %v197, %v228
    %234 = vset.pattern.permute.xlu0 0
    %235 = vperm.xlu0 %234, %v231
    %v236 = vpop.permute.xlu0 %235
    %v237 = vlaneseq
    %v238 = vshrl.u32 %v237, 7
    %v239 = vsub.s32 %v165, %v238
    %v240 = vrot.slane %v236, %v239
    %vm241 = vcmask 64512
    %v242 = vsel %vm241, %v240, 0
    %244 = vmatprep.subr.mxu0 0.0
    %245 = vmatpush1.msra.mxu0 %v21
    %246 = vmatprep.subr.mxu0 0.0
    %247 = vmatpush1.msra.mxu0 0.0
    %248 = vmatprep.subr.mxu0 0.0
    %249 = vmatpush1.msra.mxu0 0.0
    %250 = vmatprep.subr.mxu0 0.0
    %251 = vmatpush1.msra.mxu0 0.0
    %252 = vmatprep.subr.mxu0 0.0
    %253 = vmatpush1.msra.mxu0 0.0
    %254 = vmatprep.subr.mxu0 0.0
    %255 = vmatpush1.msra.mxu0 0.0
    %256 = vmatprep.subr.mxu0 0.0
    %257 = vmatpush1.msra.mxu0 0.0
    %258 = vmatprep.subr.mxu0 0.0
    %259 = vmatpush1.msra.mxu0 0.0
    %260 = vmatprep.subr.mxu0 0.0
    %261 = vmatpush1.msra.mxu0 0.0
    %262 = vmatprep.subr.mxu0 0.0
    %263 = vmatpush1.msra.mxu0 0.0
    %264 = vmatprep.subr.mxu0 0.0
    %265 = vmatpush1.msra.mxu0 0.0
    %266 = vmatprep.subr.mxu0 0.0
    %267 = vmatpush1.msra.mxu0 0.0
    %268 = vmatprep.subr.mxu0 0.0
    %269 = vmatpush1.msra.mxu0 0.0
    %270 = vmatprep.subr.mxu0 0.0
    %271 = vmatpush1.msra.mxu0 0.0
    %272 = vmatprep.subr.mxu0 0.0
    %273 = vmatpush1.msra.mxu0 0.0
    %274 = vmatprep.subr.mxu0 0.0
    %275 = vmatpush1.msra.mxu0 0.0
    %276 = vmatprep.subr.mxu0 0.0
    %277 = vmatpush1.msra.mxu0 0.0
    %278 = vmatprep.subr.mxu0 0.0
    %279 = vmatpush1.msra.mxu0 0.0
    %280 = vmatprep.subr.mxu0 0.0
    %281 = vmatpush1.msra.mxu0 0.0
    %282 = vmatprep.subr.mxu0 0.0
    %283 = vmatpush1.msra.mxu0 0.0
    %284 = vmatprep.subr.mxu0 0.0
    %285 = vmatpush1.msra.mxu0 0.0
    %286 = vmatprep.subr.mxu0 0.0
    %287 = vmatpush1.msra.mxu0 0.0
    %288 = vmatprep.subr.mxu0 0.0
    %289 = vmatpush1.msra.mxu0 0.0
    %290 = vmatprep.subr.mxu0 0.0
    %291 = vmatpush1.msra.mxu0 0.0
    %292 = vmatprep.subr.mxu0 0.0
    %293 = vmatpush1.msra.mxu0 0.0
    %294 = vmatprep.subr.mxu0 0.0
    %295 = vmatpush1.msra.mxu0 0.0
    %296 = vmatprep.subr.mxu0 0.0
    %297 = vmatpush1.msra.mxu0 0.0
    %298 = vmatprep.subr.mxu0 0.0
    %299 = vmatpush1.msra.mxu0 0.0
    %300 = vmatprep.subr.mxu0 0.0
    %301 = vmatpush1.msra.mxu0 0.0
    %302 = vmatprep.subr.mxu0 0.0
    %303 = vmatpush1.msra.mxu0 0.0
    %304 = vmatprep.subr.mxu0 0.0
    %305 = vmatpush1.msra.mxu0 0.0
    %306 = vmatprep.subr.mxu0 0.0
    %307 = vmatpush1.msra.mxu0 0.0
    %308 = vmatprep.mubr.f32.mxu0 0.0
    %309 = vmatmul.mubr.f32.gmra.mrb[0].mxu0 %v242
    %v310 = vpop.f32.mrb[0].mxu0
    %v311 = vadd.f32 0.0, %v310
    %v312 = vpop.f32.mrb[0].mxu0
    %313 = vdwg.mxu0
    %315 = vset.pattern.permute.xlu0 0
    %316 = vperm.xlu0 %315, %v232
    %v317 = vpop.permute.xlu0 %316
    %v318 = vlaneseq
    %v319 = vshrl.u32 %v318, 7
    %v320 = vsub.s32 %v165, %v319
    %v321 = vrot.slane %v317, %v320
    %v322 = vsel %vm241, %v321, 0
    %324 = vmatprep.subr.mxu0 0.0
    %325 = vmatpush1.msra.mxu0 %v22
    %326 = vmatprep.subr.mxu0 0.0
    %327 = vmatpush1.msra.mxu0 0.0
    %328 = vmatprep.subr.mxu0 0.0
    %329 = vmatpush1.msra.mxu0 0.0
    %330 = vmatprep.subr.mxu0 0.0
    %331 = vmatpush1.msra.mxu0 0.0
    %332 = vmatprep.subr.mxu0 0.0
    %333 = vmatpush1.msra.mxu0 0.0
    %334 = vmatprep.subr.mxu0 0.0
    %335 = vmatpush1.msra.mxu0 0.0
    %336 = vmatprep.subr.mxu0 0.0
    %337 = vmatpush1.msra.mxu0 0.0
    %338 = vmatprep.subr.mxu0 0.0
    %339 = vmatpush1.msra.mxu0 0.0
    %340 = vmatprep.subr.mxu0 0.0
    %341 = vmatpush1.msra.mxu0 0.0
    %342 = vmatprep.subr.mxu0 0.0
    %343 = vmatpush1.msra.mxu0 0.0
    %344 = vmatprep.subr.mxu0 0.0
    %345 = vmatpush1.msra.mxu0 0.0
    %346 = vmatprep.subr.mxu0 0.0
    %347 = vmatpush1.msra.mxu0 0.0
    %348 = vmatprep.subr.mxu0 0.0
    %349 = vmatpush1.msra.mxu0 0.0
    %350 = vmatprep.subr.mxu0 0.0
    %351 = vmatpush1.msra.mxu0 0.0
    %352 = vmatprep.subr.mxu0 0.0
    %353 = vmatpush1.msra.mxu0 0.0
    %354 = vmatprep.subr.mxu0 0.0
    %355 = vmatpush1.msra.mxu0 0.0
    %356 = vmatprep.subr.mxu0 0.0
    %357 = vmatpush1.msra.mxu0 0.0
    %358 = vmatprep.subr.mxu0 0.0
    %359 = vmatpush1.msra.mxu0 0.0
    %360 = vmatprep.subr.mxu0 0.0
    %361 = vmatpush1.msra.mxu0 0.0
    %362 = vmatprep.subr.mxu0 0.0
    %363 = vmatpush1.msra.mxu0 0.0
    %364 = vmatprep.subr.mxu0 0.0
    %365 = vmatpush1.msra.mxu0 0.0
    %366 = vmatprep.subr.mxu0 0.0
    %367 = vmatpush1.msra.mxu0 0.0
    %368 = vmatprep.subr.mxu0 0.0
    %369 = vmatpush1.msra.mxu0 0.0
    %370 = vmatprep.subr.mxu0 0.0
    %371 = vmatpush1.msra.mxu0 0.0
    %372 = vmatprep.subr.mxu0 0.0
    %373 = vmatpush1.msra.mxu0 0.0
    %374 = vmatprep.subr.mxu0 0.0
    %375 = vmatpush1.msra.mxu0 0.0
    %376 = vmatprep.subr.mxu0 0.0
    %377 = vmatpush1.msra.mxu0 0.0
    %378 = vmatprep.subr.mxu0 0.0
    %379 = vmatpush1.msra.mxu0 0.0
    %380 = vmatprep.subr.mxu0 0.0
    %381 = vmatpush1.msra.mxu0 0.0
    %382 = vmatprep.subr.mxu0 0.0
    %383 = vmatpush1.msra.mxu0 0.0
    %384 = vmatprep.subr.mxu0 0.0
    %385 = vmatpush1.msra.mxu0 0.0
    %386 = vmatprep.subr.mxu0 0.0
    %387 = vmatpush1.msra.mxu0 0.0
    %388 = vmatprep.mubr.f32.mxu0 0.0
    %389 = vmatmul.mubr.f32.gmra.mrb[0].mxu0 %v322
    %v390 = vpop.f32.mrb[0].mxu0
    %v391 = vadd.f32 0.0, %v390
    %v392 = vpop.f32.mrb[0].mxu0
    %393 = vdwg.mxu0
    %v396 = vrot.slane %v391, 7
    %v397 = vsel %vm174, %v396, %v311
    %vm399 = vcmask 254976
    %400 = vst.msk [vmem:[#allocation2] sm:$0x3] %vm399, %v397
    %v401 = vsel %vm174, %v321, %v240
    %403 = vst.msk [vmem:[#allocation4] sm:$0x3] %vm177, %v401
    // Predicated region
    $region18: #{bahdanau_attention.1} parent=1 // pred_check
      _
    $region19: #{bahdanau_attention.1} parent=1 // pred_check_branch
      %405 = sbr.rel (0) target = $region21
    $region20: #{bahdanau_attention.1} parent=1 // pred_region
      %s407 = ssub.s32 32, 32
      %408 = vsyncadd [#allocation3], %s407
      %s410 = sshll.u32 [#allocation2], 4
      %s411 = int_to_ptr.vmem [resolvable:$true] %s410
      %413 = dma.vmem_to_hbm [thread:$0]  %s411, 32, %s4, [#allocation3]
    $region21: #{bahdanau_attention.1} parent=1 // pred_fallthru
      _
    // Predicated region
    $region22: #{bahdanau_attention.1} parent=1 // pred_check
      _
    $region23: #{bahdanau_attention.1} parent=1 // pred_check_branch
      %415 = sbr.rel (0) target = $region25
    $region24: #{bahdanau_attention.1} parent=1 // pred_region
      %s417 = ssub.s32 32, 32
      %418 = vsyncadd [#allocation5], %s417
      %s420 = sshll.u32 [#allocation4], 4
      %s421 = int_to_ptr.vmem [resolvable:$true] %s420
      %423 = dma.vmem_to_hbm [thread:$0]  %s421, 32, %s5, [#allocation5]
    $region25: #{bahdanau_attention.1} parent=1 // pred_fallthru
      _
    // Predicated region
    $region26: #{bahdanau_attention.1} parent=1 // pred_check
      _
    $region27: #{bahdanau_attention.1} parent=1 // pred_check_branch
      %425 = sbr.rel (0) target = $region29
    $region28: #{bahdanau_attention.1} parent=1 // pred_region
      %426 = dma.done [#allocation3], 32
    $region29: #{bahdanau_attention.1} parent=1 // pred_fallthru
      _
    // Predicated region
    $region30: #{bahdanau_attention.1} parent=1 // pred_check
      _
    $region31: #{bahdanau_attention.1} parent=1 // pred_check_branch
      %428 = sbr.rel (0) target = $region33
    $region32: #{bahdanau_attention.1} parent=1 // pred_region
      %429 = dma.done [#allocation5], 32
    $region33: #{bahdanau_attention.1} parent=1 // pred_fallthru
      _
    %430 = vsyncpa [#allocation3], 1
    %431 = vsyncpa [#allocation5], 1

</llo_original>
